<compile_context>
chip_gen: v6e
topology: v6e:2x2x1
jax: 0.10.0
libtpu: 0.0.40
codegen_flags: <defaults>
</compile_context>

<pallas_src>
import functools
import math

import jax
import jax.numpy as jnp
from jax.experimental import pallas as pl
from jax.experimental.pallas import tpu as pltpu


# Safe on all generations (v5e default scoped limit is 16 MiB; physical VMEM is
# >= 64 MiB everywhere).  At real Whisper sizes raise per generation
# (<= ~56 MiB on v7x, up to ~100 MiB on v5e/v6e).
_BLOCK_VMEM_LIMIT = 32 * 1024 * 1024


# ----------------------------------------------------------------------------
# in-kernel helpers (all f32 math)
# ----------------------------------------------------------------------------
def _gelu_exact(x):
    # matches torch.nn.functional.gelu / nn.GELU() (exact erf form)
    return 0.5 * x * (1.0 + jax.lax.erf(x * (1.0 / math.sqrt(2.0))))


def _layer_norm(x, gamma, beta, eps=1e-5):
    # matches nn.LayerNorm over the last dim, computed in float32
    xf = x.astype(jnp.float32)
    mu = jnp.mean(xf, axis=-1, keepdims=True)
    xc = xf - mu
    var = jnp.mean(xc * xc, axis=-1, keepdims=True)
    inv = jax.lax.rsqrt(var + eps)
    return xc * inv * gamma + beta


def _full_spec(shape):
    zeros = (0,) * len(shape)
    return pl.BlockSpec(shape, lambda *_: zeros)      # weight-resident block


def _bt_tile_spec(t_tile, c):
    return pl.BlockSpec((None, t_tile, c), lambda bi, ti: (bi, ti, 0))


def _pick_time_tile(t):
    for cand in (512, 256, 128, 64, 32, 16, 8):
        if cand < t and t % cand == 0:
            return cand
    return t  # NOTE: at real Whisper sizes pad T to a tile multiple instead.


# ----------------------------------------------------------------------------
# Kernel 1: conv1 (k=3, stride=1, pad=1) + bias + GELU
#   single padded input, 3 shifted contiguous slices -> 3 matmuls
# ----------------------------------------------------------------------------
def _conv1_gelu_kernel(x_ref, w_ref, b_ref, o_ref):
    # x_ref: (T_in+2, Cin) bf16, w_ref: (3, Cin, Cout) bf16, b_ref: (1, Cout) f32
    t_out = o_ref.shape[0]
    acc = jnp.dot(x_ref[0:t_out, :], w_ref[0], preferred_element_type=jnp.float32)
    acc = acc + jnp.dot(x_ref[1:t_out + 1, :], w_ref[1],
                        preferred_element_type=jnp.float32)
    acc = acc + jnp.dot(x_ref[2:t_out + 2, :], w_ref[2],
                        preferred_element_type=jnp.float32)
    acc = acc + b_ref[...]
    o_ref[...] = _gelu_exact(acc).astype(o_ref.dtype)


def conv1_gelu(x_pad, w, b):
    B, t_pad, cin = x_pad.shape
    t_out = t_pad - 2
    cout = w.shape[-1]
    return pl.pallas_call(
        _conv1_gelu_kernel,
        out_shape=jax.ShapeDtypeStruct((B, t_out, cout), jnp.bfloat16),
        grid=(B,),
        in_specs=[
            pl.BlockSpec((None, t_pad, cin), lambda bi: (bi, 0, 0)),
            _full_spec((3, cin, cout)),
            _full_spec((1, cout)),
        ],
        out_specs=pl.BlockSpec((None, t_out, cout), lambda bi: (bi, 0, 0)),
        compiler_params=pltpu.CompilerParams(dimension_semantics=("parallel",)),
    )(x_pad, w, b)


# ----------------------------------------------------------------------------
# Kernel 2: conv2 (k=3, stride=2, pad=1) + bias + GELU + positional embedding
#   stride handled via even/odd rows of the padded input (no data duplication)
# ----------------------------------------------------------------------------
def _conv2_gelu_pos_kernel(xe_ref, xo_ref, w_ref, b_ref, pos_ref, o_ref):
    # xe_ref / xo_ref: (T_out+1, C) bf16 = even / odd rows of padded conv1 out
    # y[t] = x_pad[2t]*w0 + x_pad[2t+1]*w1 + x_pad[2t+2]*w2
    t_out = o_ref.shape[0]
    acc = jnp.dot(xe_ref[0:t_out, :], w_ref[0], preferred_element_type=jnp.float32)
    acc = acc + jnp.dot(xo_ref[0:t_out, :], w_ref[1],
                        preferred_element_type=jnp.float32)
    acc = acc + jnp.dot(xe_ref[1:t_out + 1, :], w_ref[2],
                        preferred_element_type=jnp.float32)
    acc = acc + b_ref[...]
    o_ref[...] = _gelu_exact(acc) + pos_ref[...]          # f32 residual stream


def conv2_gelu_pos(xe, xo, w, b, pos):
    B, tp1, c = xe.shape
    t_out = tp1 - 1
    return pl.pallas_call(
        _conv2_gelu_pos_kernel,
        out_shape=jax.ShapeDtypeStruct((B, t_out, c), jnp.float32),
        grid=(B,),
        in_specs=[
            pl.BlockSpec((None, tp1, c), lambda bi: (bi, 0, 0)),
            pl.BlockSpec((None, tp1, c), lambda bi: (bi, 0, 0)),
            _full_spec((3, c, c)),
            _full_spec((1, c)),
            _full_spec((t_out, c)),
        ],
        out_specs=pl.BlockSpec((None, t_out, c), lambda bi: (bi, 0, 0)),
        compiler_params=pltpu.CompilerParams(dimension_semantics=("parallel",)),
    )(xe, xo, w, b, pos)


# ----------------------------------------------------------------------------
# Kernel 3: LN1 + QKV projections (time-tiled). q is pre-scaled by D**-0.5.
# ----------------------------------------------------------------------------
def _qkv_kernel(x_ref, g_ref, b_ref, qw_ref, qb_ref, kw_ref, vw_ref, vb_ref,
                q_ref, k_ref, v_ref, *, d_head):
    h = _layer_norm(x_ref[...], g_ref[...], b_ref[...]).astype(jnp.bfloat16)
    q = jnp.dot(h, qw_ref[...], preferred_element_type=jnp.float32) + qb_ref[...]
    k = jnp.dot(h, kw_ref[...], preferred_element_type=jnp.float32)   # no bias
    v = jnp.dot(h, vw_ref[...], preferred_element_type=jnp.float32) + vb_ref[...]
    q_ref[...] = (q * (float(d_head) ** -0.5)).astype(q_ref.dtype)
    k_ref[...] = k.astype(k_ref.dtype)
    v_ref[...] = v.astype(v_ref.dtype)


def qkv_proj(x, ln_g, ln_b, qw, qb, kw, vw, vb, n_head, t_tile):
    B, T, C = x.shape
    nt = T // t_tile
    out_sd = jax.ShapeDtypeStruct((B, T, C), jnp.bfloat16)
    return pl.pallas_call(
        functools.partial(_qkv_kernel, d_head=C // n_head),
        out_shape=(out_sd, out_sd, out_sd),
        grid=(B, nt),
        in_specs=[
            _bt_tile_spec(t_tile, C),
            _full_spec((1, C)), _full_spec((1, C)),
            _full_spec((C, C)), _full_spec((1, C)),
            _full_spec((C, C)),
            _full_spec((C, C)), _full_spec((1, C)),
        ],
        out_specs=(_bt_tile_spec(t_tile, C),
                   _bt_tile_spec(t_tile, C),
                   _bt_tile_spec(t_tile, C)),
        compiler_params=pltpu.CompilerParams(
            dimension_semantics=("parallel", "parallel"),
            vmem_limit_bytes=_BLOCK_VMEM_LIMIT),
    )(x, ln_g, ln_b, qw, qb, kw, vw, vb)


# ----------------------------------------------------------------------------
# Kernel 4: multi-head attention (query-time-tiled, full K/V per batch).
#   Heads are processed one at a time and stored straight into the output
#   channel slice (no concatenate).  Softmax math in f32, EUP reciprocal.
# ----------------------------------------------------------------------------
def _attn_kernel(q_ref, k_ref, v_ref, o_ref, *, n_head):
    d = q_ref.shape[-1] // n_head
    for hh in range(n_head):
        lo, hi = hh * d, (hh + 1) * d
        qh = q_ref[:, lo:hi]                        # (Tt, D) bf16, pre-scaled
        kh = k_ref[:, lo:hi]                        # (T,  D) bf16
        s = jax.lax.dot_general(qh, kh, (((1,), (1,)), ((), ())),
                                preferred_element_type=jnp.float32)  # (Tt, T)
        s = s - jnp.max(s, axis=-1, keepdims=True)
        p = jnp.exp(s)
        p = p * pl.reciprocal(jnp.sum(p, axis=-1, keepdims=True), approx=True)
        o_h = jnp.dot(p.astype(jnp.bfloat16), v_ref[:, lo:hi],
                      preferred_element_type=jnp.float32)            # (Tt, D)
        o_ref[:, lo:hi] = o_h.astype(o_ref.dtype)


def attention(q, k, v, n_head, t_tile):
    B, T, C = q.shape
    nt = T // t_tile
    return pl.pallas_call(
        functools.partial(_attn_kernel, n_head=n_head),
        out_shape=jax.ShapeDtypeStruct((B, T, C), jnp.bfloat16),
        grid=(B, nt),
        in_specs=[
            _bt_tile_spec(t_tile, C),                              # q tile
            pl.BlockSpec((None, T, C), lambda bi, ti: (bi, 0, 0)),  # full K
            pl.BlockSpec((None, T, C), lambda bi, ti: (bi, 0, 0)),  # full V
        ],
        out_specs=_bt_tile_spec(t_tile, C),
        compiler_params=pltpu.CompilerParams(
            dimension_semantics=("parallel", "parallel"),
            vmem_limit_bytes=_BLOCK_VMEM_LIMIT),
    )(q, k, v)


# ----------------------------------------------------------------------------
# Kernel 5: out-projection + residual + LN2 + GELU-MLP + residual (time-tiled)
# ----------------------------------------------------------------------------
def _out_mlp_kernel(x_ref, wv_ref, ow_ref, ob_ref, g_ref, b_ref,
                    w1_ref, b1_ref, w2_ref, b2_ref, o_ref):
    x = x_ref[...]                                              # (Tt, C) f32
    x = x + jnp.dot(wv_ref[...], ow_ref[...],
                    preferred_element_type=jnp.float32) + ob_ref[...]
    h = _layer_norm(x, g_ref[...], b_ref[...]).astype(jnp.bfloat16)
    m = jnp.dot(h, w1_ref[...], preferred_element_type=jnp.float32) + b1_ref[...]
    m = _gelu_exact(m).astype(jnp.bfloat16)
    x = x + jnp.dot(m, w2_ref[...], preferred_element_type=jnp.float32) + b2_ref[...]
    o_ref[...] = x.astype(o_ref.dtype)


def out_proj_mlp(x, wv, ow, ob, ln_g, ln_b, w1, b1, w2, b2, t_tile):
    B, T, C = x.shape
    nt = T // t_tile
    c4 = w1.shape[-1]
    return pl.pallas_call(
        _out_mlp_kernel,
        out_shape=jax.ShapeDtypeStruct((B, T, C), jnp.float32),
        grid=(B, nt),
        in_specs=[
            _bt_tile_spec(t_tile, C),            # residual x (f32)
            _bt_tile_spec(t_tile, C),            # attention output (bf16)
            _full_spec((C, C)), _full_spec((1, C)),
            _full_spec((1, C)), _full_spec((1, C)),
            _full_spec((C, c4)), _full_spec((1, c4)),
            _full_spec((c4, C)), _full_spec((1, C)),
        ],
        out_specs=_bt_tile_spec(t_tile, C),
        compiler_params=pltpu.CompilerParams(
            dimension_semantics=("parallel", "parallel"),
            vmem_limit_bytes=_BLOCK_VMEM_LIMIT),
    )(x, wv, ow, ob, ln_g, ln_b, w1, b1, w2, b2)


def residual_block(x, blk, n_head, t_tile):
    q, k, v = qkv_proj(x, blk['ln1_g'], blk['ln1_b'],
                       blk['qw'], blk['qb'], blk['kw'], blk['vw'], blk['vb'],
                       n_head, t_tile)
    wv = attention(q, k, v, n_head, t_tile)
    return out_proj_mlp(x, wv, blk['ow'], blk['ob'],
                        blk['ln2_g'], blk['ln2_b'],
                        blk['w1'], blk['b1'], blk['w2'], blk['b2'], t_tile)


# ----------------------------------------------------------------------------
# parameters / positional embedding / full forward
# ----------------------------------------------------------------------------
def sinusoids(length, channels, max_timescale=10000):
    assert channels % 2 == 0
    log_inc = math.log(max_timescale) / (channels // 2 - 1)
    inv = jnp.exp(-log_inc * jnp.arange(channels // 2, dtype=jnp.float32))
    t = jnp.arange(length, dtype=jnp.float32)[:, None] * inv[None, :]
    return jnp.concatenate([jnp.sin(t), jnp.cos(t)], axis=1)


def init_params(key, n_mels, n_ctx, n_state, n_head, n_layer):
    keys = iter(jax.random.split(key, 4 + 11 * max(n_layer, 1)))

    def nrm(shape, scale=0.05, dtype=jnp.bfloat16):
        return (scale * jax.random.normal(next(keys), shape, jnp.float32)).astype(dtype)

    params = dict(
        n_head=n_head,
        # matmul weights stored in bf16 (MXU operands); biases / LN in f32
        conv1_w=nrm((3, n_mels, n_state)),              # (K, Cin, Cout)
        conv1_b=nrm((1, n_state), dtype=jnp.float32),
        conv2_w=nrm((3, n_state, n_state)),
        conv2_b=nrm((1, n_state), dtype=jnp.float32),
        pos_emb=sinusoids(n_ctx, n_state),
        blocks=[],
    )
    for _ in range(n_layer):
        params['blocks'].append(dict(
            ln1_g=jnp.ones((1, n_state), jnp.float32),
            ln1_b=jnp.zeros((1, n_state), jnp.float32),
            qw=nrm((n_state, n_state)), qb=nrm((1, n_state), dtype=jnp.float32),
            kw=nrm((n_state, n_state)),
            vw=nrm((n_state, n_state)), vb=nrm((1, n_state), dtype=jnp.float32),
            ow=nrm((n_state, n_state)), ob=nrm((1, n_state), dtype=jnp.float32),
            ln2_g=jnp.ones((1, n_state), jnp.float32),
            ln2_b=jnp.zeros((1, n_state), jnp.float32),
            w1=nrm((n_state, 4 * n_state)),
            b1=nrm((1, 4 * n_state), dtype=jnp.float32),
            w2=nrm((4 * n_state, n_state)),
            b2=nrm((1, n_state), dtype=jnp.float32),
        ))
    return params


def audio_encoder_forward(params, mel):
    """mel: (B, n_mels, T_in) float32 (PyTorch NCT layout).
    Returns (B, T_in//2, n_state) float32, matching AudioEncoder.forward
    with o_layer='last' (ln_post is not applied on this path)."""
    x = jnp.transpose(mel, (0, 2, 1))                       # (B, T_in, n_mels)

    # conv1: pad once, cast operands to bf16, shifts done inside the kernel
    x = jnp.pad(x, ((0, 0), (1, 1), (0, 0))).astype(jnp.bfloat16)
    x = conv1_gelu(x, params['conv1_w'], params['conv1_b'])  # (B, T_in, C) bf16

    # conv2 (stride 2): even/odd split of the padded input supplies the taps
    xp = jnp.pad(x, ((0, 0), (1, 1), (0, 0)))
    xe, xo = xp[:, 0::2, :], xp[:, 1::2, :]                  # (B, T_out+1, C)
    t_out = x.shape[1] // 2
    pos = params['pos_emb'][:t_out]
    if not params['blocks']:
        pos = jnp.zeros_like(pos)  # n_layer == 0: reference skips the pos add
    x = conv2_gelu_pos(xe, xo, params['conv2_w'], params['conv2_b'], pos)

    if not params['blocks']:
        return x

    t_tile = _pick_time_tile(x.shape[1])
    for blk in params['blocks']:
        x = residual_block(x, blk, params['n_head'], t_tile)
    return x


# ----------------------------------------------------------------------------
if __name__ == "__main__":
    # small shapes consistent with the module; T after conv2 == n_ctx
    B, n_mels, T_in = 2, 16, 32
    n_ctx, n_state, n_head, n_layer = 16, 64, 4, 2

    key = jax.random.PRNGKey(0)
    kp, kx = jax.random.split(key)
    params = init_params(kp, n_mels, n_ctx, n_state, n_head, n_layer)
    mel = jax.random.normal(kx, (B, n_mels, T_in), jnp.float32)

    out = audio_encoder_forward(params, mel)
    jax.block_until_ready(out)
    assert out.shape == (B, n_ctx, n_state)
    print("KERNEL_OK")
</pallas_src>

<mosaic_0001>
module attributes {stable_mosaic.version = 11 : i64} {
  func.func @_conv1_gelu_kernel(%arg0: i32, %arg1: memref<1x34x16xbf16, #tpu.memory_space<vmem>>, %arg2: memref<3x16x64xbf16, #tpu.memory_space<vmem>>, %arg3: memref<1x64xf32, #tpu.memory_space<vmem>>, %arg4: memref<1x32x64xbf16, #tpu.memory_space<vmem>>) attributes {dimension_semantics = [#tpu.dimension_semantics<parallel>], iteration_bounds = array<i64: 2>, scalar_prefetch = 0 : i64, scratch_operands = 0 : i64, tpu.core_type = #tpu.core_type<tc>, window_params = [{transform_indices = @transform_0, window_bounds = array<i64: 1, 34, 16>}, {pipeline_mode = #tpu.pipeline_mode<synchronous>, transform_indices = @transform_1, window_bounds = array<i64: 3, 16, 64>}, {pipeline_mode = #tpu.pipeline_mode<synchronous>, transform_indices = @transform_2, window_bounds = array<i64: 1, 64>}, {transform_indices = @transform_3, window_bounds = array<i64: 1, 32, 64>}]} {
    %c0 = arith.constant 0 : index
    %c0_0 = arith.constant 0 : index
    %c0_1 = arith.constant 0 : index
    %0 = vector.load %arg1[%c0, %c0_0, %c0_1] : memref<1x34x16xbf16, #tpu.memory_space<vmem>>, vector<1x32x16xbf16>
    %1 = vector.shape_cast %0 : vector<1x32x16xbf16> to vector<32x16xbf16>
    %c0_2 = arith.constant 0 : index
    %c0_3 = arith.constant 0 : index
    %c0_4 = arith.constant 0 : index
    %2 = vector.load %arg2[%c0_2, %c0_3, %c0_4] : memref<3x16x64xbf16, #tpu.memory_space<vmem>>, vector<1x16x64xbf16>
    %3 = vector.shape_cast %2 : vector<1x16x64xbf16> to vector<16x64xbf16>
    %cst = arith.constant dense<0.000000e+00> : vector<32x64xf32>
    %4 = tpu.matmul %1, %3, %cst {dimension_numbers = #tpu.dot_dimension_numbers<[1], [0], [0], [1], [0, 0, 1, 1], [], []>} : vector<32x16xbf16>, vector<16x64xbf16>, vector<32x64xf32> -> vector<32x64xf32>
    %c0_5 = arith.constant 0 : index
    %c1 = arith.constant 1 : index
    %c0_6 = arith.constant 0 : index
    %5 = vector.load %arg1[%c0_5, %c1, %c0_6] : memref<1x34x16xbf16, #tpu.memory_space<vmem>>, vector<1x32x16xbf16>
    %6 = vector.shape_cast %5 : vector<1x32x16xbf16> to vector<32x16xbf16>
    %c1_7 = arith.constant 1 : index
    %c0_8 = arith.constant 0 : index
    %c0_9 = arith.constant 0 : index
    %7 = vector.load %arg2[%c1_7, %c0_8, %c0_9] : memref<3x16x64xbf16, #tpu.memory_space<vmem>>, vector<1x16x64xbf16>
    %8 = vector.shape_cast %7 : vector<1x16x64xbf16> to vector<16x64xbf16>
    %cst_10 = arith.constant dense<0.000000e+00> : vector<32x64xf32>
    %9 = tpu.matmul %6, %8, %cst_10 {dimension_numbers = #tpu.dot_dimension_numbers<[1], [0], [0], [1], [0, 0, 1, 1], [], []>} : vector<32x16xbf16>, vector<16x64xbf16>, vector<32x64xf32> -> vector<32x64xf32>
    %10 = arith.addf %4, %9 : vector<32x64xf32>
    %c0_11 = arith.constant 0 : index
    %c2 = arith.constant 2 : index
    %c0_12 = arith.constant 0 : index
    %11 = vector.load %arg1[%c0_11, %c2, %c0_12] : memref<1x34x16xbf16, #tpu.memory_space<vmem>>, vector<1x32x16xbf16>
    %12 = vector.shape_cast %11 : vector<1x32x16xbf16> to vector<32x16xbf16>
    %c2_13 = arith.constant 2 : index
    %c0_14 = arith.constant 0 : index
    %c0_15 = arith.constant 0 : index
    %13 = vector.load %arg2[%c2_13, %c0_14, %c0_15] : memref<3x16x64xbf16, #tpu.memory_space<vmem>>, vector<1x16x64xbf16>
    %14 = vector.shape_cast %13 : vector<1x16x64xbf16> to vector<16x64xbf16>
    %cst_16 = arith.constant dense<0.000000e+00> : vector<32x64xf32>
    %15 = tpu.matmul %12, %14, %cst_16 {dimension_numbers = #tpu.dot_dimension_numbers<[1], [0], [0], [1], [0, 0, 1, 1], [], []>} : vector<32x16xbf16>, vector<16x64xbf16>, vector<32x64xf32> -> vector<32x64xf32>
    %16 = arith.addf %10, %15 : vector<32x64xf32>
    %c0_17 = arith.constant 0 : index
    %c0_18 = arith.constant 0 : index
    %17 = vector.load %arg3[%c0_17, %c0_18] : memref<1x64xf32, #tpu.memory_space<vmem>>, vector<1x64xf32>
    %18 = vector.broadcast %17 : vector<1x64xf32> to vector<32x64xf32>
    %19 = arith.addf %16, %18 : vector<32x64xf32>
    %cst_19 = arith.constant 5.000000e-01 : f32
    %20 = vector.broadcast %cst_19 : f32 to vector<32x64xf32>
    %21 = arith.mulf %20, %19 : vector<32x64xf32>
    %cst_20 = arith.constant 0.707106769 : f32
    %22 = vector.broadcast %cst_20 : f32 to vector<32x64xf32>
    %23 = arith.mulf %19, %22 : vector<32x64xf32>
    %24 = math.erf %23 : vector<32x64xf32>
    %cst_21 = arith.constant 1.000000e+00 : f32
    %25 = vector.broadcast %cst_21 : f32 to vector<32x64xf32>
    %26 = arith.addf %25, %24 : vector<32x64xf32>
    %27 = arith.mulf %21, %26 : vector<32x64xf32>
    %28 = arith.truncf %27 : vector<32x64xf32> to vector<32x64xbf16>
    %c0_22 = arith.constant 0 : index
    %c0_23 = arith.constant 0 : index
    %c0_24 = arith.constant 0 : index
    %29 = vector.load %arg4[%c0_22, %c0_23, %c0_24] : memref<1x32x64xbf16, #tpu.memory_space<vmem>>, vector<1x32x64xbf16>
    %30 = vector.shape_cast %29 : vector<1x32x64xbf16> to vector<32x64xbf16>
    %31 = vector.shape_cast %28 : vector<32x64xbf16> to vector<1x32x64xbf16>
    tpu.vector_store %arg4[%c0_22, %c0_23, %c0_24], %31 {strides = array<i32>} : memref<1x32x64xbf16, #tpu.memory_space<vmem>>, vector<1x32x64xbf16>,
    return
  }
  func.func @transform_0(%arg0: i32) -> (i32, i32, i32) {
    %c0_i32 = arith.constant 0 : i32
    %c0_i32_0 = arith.constant 0 : i32
    %c0_i32_1 = arith.constant 0 : i32
    return %arg0, %c0_i32, %c0_i32_0 : i32, i32, i32
  }
  func.func @transform_1(%arg0: i32) -> (i32, i32, i32) {
    %c0_i32 = arith.constant 0 : i32
    %c0_i32_0 = arith.constant 0 : i32
    %c0_i32_1 = arith.constant 0 : i32
    %c0_i32_2 = arith.constant 0 : i32
    return %c0_i32, %c0_i32_0, %c0_i32_1 : i32, i32, i32
  }
  func.func @transform_2(%arg0: i32) -> (i32, i32) {
    %c0_i32 = arith.constant 0 : i32
    %c0_i32_0 = arith.constant 0 : i32
    %c0_i32_1 = arith.constant 0 : i32
    return %c0_i32, %c0_i32_0 : i32, i32
  }
  func.func @transform_3(%arg0: i32) -> (i32, i32, i32) {
    %c0_i32 = arith.constant 0 : i32
    %c0_i32_0 = arith.constant 0 : i32
    %c0_i32_1 = arith.constant 0 : i32
    return %arg0, %c0_i32, %c0_i32_0 : i32, i32, i32
  }
}

</mosaic_0001>

<llo_original>
// kernel: tpu_custom_call.1
$region0: #{tpu_custom_call.1}
  #allocation0 [shape = 'u32[]', space=smem, size = 0x4, offset = 0x4, fixed_abs, tag = 'smem constant byte address 0x4 - core index']
  #allocation1 [shape = 'u32[144,128]{1,0:T(1,128)}', space=vmem, size = 0x12000, scoped, tag = 'internal scratch']
  %s0 = inlined_call_operand.vmem [shape: bf16[2,34,16], index: 0, kind: input, shape index: {}]
  %s1 = inlined_call_operand.vmem [shape: bf16[3,16,64], index: 1, kind: input, shape index: {}]
  %s2 = inlined_call_operand.vmem [shape: f32[1,64], index: 2, kind: input, shape index: {}]
  %s3 = inlined_call_operand.hbm [shape: bf16[2,32,64], index: 3, kind: output, shape index: {}]
  %s4 = sld [smem:[#allocation0]]
  $region45: #{tpu_custom_call.1} parent=0
    _
  %s6 = ssub.s32 1, %s4
  %s7 = scalar_select 0, %s6, %s4
  $region1: #{tpu_custom_call.1} parent=0
    #allocation2 [shape = 'u8[16384]{0}', space=vmem, size = 0x4000, scoped, tag = 'output window, operand 0']
    #allocation3 [shape = 's32[2]{0}', space=sflag, size = 0x8, scoped, tag = 'scoped memory for tpu_custom_call.1']
    %8 = vsyncpa [#allocation3], 0
    %s9 = scalar_lea.sflag [#allocation3], 1
    %10 = vsyncpa %s9, 0
    loop: start=0, step=1, limit=4
    $region2: #{tpu_custom_call.1} parent=1 // loop_pre_header
      _
    $region3: #{tpu_custom_call.1} parent=1 // loop_header
      %s12 = sphi 0, %s16
      %p13 = scmp.ge.s32.totalorder %s12, 4
      %s22 = sphi 0, %s24
      %s25 = sphi 0, %s22
      %s26 = sphi 0, %s25
      %s42 = sphi 0, %s26
      %s46 = sphi 0, %s46
      %s48 = sphi 0, %s46
      %s49 = sphi 0, %s48
      %s63 = sphi 0, %s49
      %s67 = sphi 0, %s67
      %s69 = sphi 0, %s67
      %s70 = sphi 0, %s69
      %s84 = sphi 0, %s70
      %s90 = sphi 0, %s92
      %s93 = sphi 0, %s90
      %s94 = sphi 0, %s93
      %s110 = sphi 0, %s94
    $region4: #{tpu_custom_call.1} parent=1 // loop_header_branch
      %15 = sbr.rel (%p13) target = $region8
    $region5: #{tpu_custom_call.1} parent=1 // loop_body
      %s17 = ssub.s32 %s12, 1
      %s18 = ssub.s32 %s12, 2
      %s19 = sadd.s32 %s12, 1
      %s20 = ssub.s32 %s12, %s19
      %p21 = scmp.eq.s32.totalorder %s20, 0
      %s23 = sadd.s32 %s22, 1
      %s24 = scalar_select %p21, %s22, %s23
      %p27 = pneg %p21
      %p28 = scmp.eq.s32.totalorder %s12, 1
      %p29 = por %p27, %p28
      %p30 = scmp.ne.s32.totalorder %s22, %s25
      %p31 = scmp.eq.s32.totalorder %s12, 0
      %p32 = por %p30, %p31
      %p33 = scmp.ne.s32.totalorder %s22, %s25
      %p34 = scmp.eq.s32.totalorder %s17, 1
      %p35 = por %p33, %p34
      %p36 = scmp.ne.s32.totalorder %s25, %s26
      %p37 = scmp.eq.s32.totalorder %s17, 0
      %p38 = por %p36, %p37
      %p39 = scmp.ne.s32.totalorder %s25, %s26
      %p40 = scmp.eq.s32.totalorder %s18, 1
      %p41 = por %p39, %p40
      %p43 = scmp.ne.s32.totalorder %s26, %s42
      %p44 = scmp.eq.s32.totalorder %s18, 0
      %p45 = por %p43, %p44
      %s47 = sadd.s32 %s46, 1
      %p50 = scmp.eq.s32.totalorder %s12, 1
      %p51 = scmp.ne.s32.totalorder %s46, %s48
      %p52 = scmp.eq.s32.totalorder %s12, 0
      %p53 = por %p51, %p52
      %p54 = scmp.ne.s32.totalorder %s46, %s48
      %p55 = scmp.eq.s32.totalorder %s17, 1
      %p56 = por %p54, %p55
      %p57 = scmp.ne.s32.totalorder %s48, %s49
      %p58 = scmp.eq.s32.totalorder %s17, 0
      %p59 = por %p57, %p58
      %p60 = scmp.ne.s32.totalorder %s48, %s49
      %p61 = scmp.eq.s32.totalorder %s18, 1
      %p62 = por %p60, %p61
      %p64 = scmp.ne.s32.totalorder %s49, %s63
      %p65 = scmp.eq.s32.totalorder %s18, 0
      %p66 = por %p64, %p65
      %s68 = sadd.s32 %s67, 1
      %p71 = scmp.eq.s32.totalorder %s12, 1
      %p72 = scmp.ne.s32.totalorder %s67, %s69
      %p73 = scmp.eq.s32.totalorder %s12, 0
      %p74 = por %p72, %p73
      %p75 = scmp.ne.s32.totalorder %s67, %s69
      %p76 = scmp.eq.s32.totalorder %s17, 1
      %p77 = por %p75, %p76
      %p78 = scmp.ne.s32.totalorder %s69, %s70
      %p79 = scmp.eq.s32.totalorder %s17, 0
      %p80 = por %p78, %p79
      %p81 = scmp.ne.s32.totalorder %s69, %s70
      %p82 = scmp.eq.s32.totalorder %s18, 1
      %p83 = por %p81, %p82
      %p85 = scmp.ne.s32.totalorder %s70, %s84
      %p86 = scmp.eq.s32.totalorder %s18, 0
      %p87 = por %p85, %p86
      %s88 = ssub.s32 %s12, %s19
      %p89 = scmp.eq.s32.totalorder %s88, 0
      %s91 = sadd.s32 %s90, 1
      %s92 = scalar_select %p89, %s90, %s91
      %p95 = pneg %p89
      %p96 = scmp.eq.s32.totalorder %s12, 1
      %p97 = por %p95, %p96
      %p98 = scmp.ne.s32.totalorder %s90, %s93
      %p99 = scmp.eq.s32.totalorder %s12, 0
      %p100 = por %p98, %p99
      %p101 = scmp.ne.s32.totalorder %s90, %s93
      %p102 = scmp.eq.s32.totalorder %s17, 1
      %p103 = por %p101, %p102
      %p104 = scmp.ne.s32.totalorder %s93, %s94
      %p105 = scmp.eq.s32.totalorder %s17, 0
      %p106 = por %p104, %p105
      %p107 = scmp.ne.s32.totalorder %s93, %s94
      %p108 = scmp.eq.s32.totalorder %s18, 1
      %p109 = por %p107, %p108
      %p111 = scmp.ne.s32.totalorder %s94, %s110
      %p112 = scmp.eq.s32.totalorder %s18, 0
      %p113 = por %p111, %p112
      %p114 = scmp.le.s32.totalorder 1, %s12
      %p115 = scmp.lt.s32.totalorder %s12, 3
      %p116 = pnand %p114, %p115
      %p117 = pneg %p116
      // Predicated region
      $region9: #{tpu_custom_call.1} parent=5 // pred_check
        _
      $region10: #{tpu_custom_call.1} parent=5 // pred_check_branch
        %119 = sbr.rel (%p116) target = $region12
      $region11: #{tpu_custom_call.1} parent=5 // pred_region
        %s120 = ssub.s32 %s12, 1
        // Predicated region
        $region13: #{tpu_custom_call.1} parent=11 // pred_check
          %p121 = pneg %p59
        $region14: #{tpu_custom_call.1} parent=11 // pred_check_branch
          %123 = sbr.rel (%p121) target = $region16
        $region15: #{tpu_custom_call.1} parent=11 // pred_region
          _
        $region16: #{tpu_custom_call.1} parent=11 // pred_fallthru
          _
        // Predicated region
        $region17: #{tpu_custom_call.1} parent=11 // pred_check
          %p124 = pneg %p80
        $region18: #{tpu_custom_call.1} parent=11 // pred_check_branch
          %126 = sbr.rel (%p124) target = $region20
        $region19: #{tpu_custom_call.1} parent=11 // pred_region
          _
        $region20: #{tpu_custom_call.1} parent=11 // pred_fallthru
          _
      $region12: #{tpu_custom_call.1} parent=5 // pred_fallthru
        _
      %p127 = scmp.lt.s32.totalorder %s12, 2
      // Predicated region
      $region21: #{tpu_custom_call.1} parent=5 // pred_check
        %p128 = pneg %p127
      $region22: #{tpu_custom_call.1} parent=5 // pred_check_branch
        %130 = sbr.rel (%p128) target = $region24
      $region23: #{tpu_custom_call.1} parent=5 // pred_region
        // Predicated region
        $region25: #{tpu_custom_call.1} parent=23 // pred_check
          %p131 = pneg %p32
        $region26: #{tpu_custom_call.1} parent=23 // pred_check_branch
          %133 = sbr.rel (%p131) target = $region28
        $region27: #{tpu_custom_call.1} parent=23 // pred_region
          %p134 = scmp.lt.s32.totalorder %s12, 1
          %s135 = scalar_select %p134, %s12, 1
          %s136 = smul.addr %s135, 5
          %s137 = smul.addr %s136, 4
          %s138 = scalar_lea.vmem %s0, %s137
        $region28: #{tpu_custom_call.1} parent=23 // pred_fallthru
          _
      $region24: #{tpu_custom_call.1} parent=5 // pred_fallthru
        _
      %p139 = scmp.le.s32.totalorder 1, %s12
      %p140 = scmp.lt.s32.totalorder %s12, 3
      %p141 = pnand %p139, %p140
      %p142 = pneg %p141
      // Predicated region
      $region29: #{tpu_custom_call.1} parent=5 // pred_check
        _
      $region30: #{tpu_custom_call.1} parent=5 // pred_check_branch
        %144 = sbr.rel (%p141) target = $region32
      $region31: #{tpu_custom_call.1} parent=5 // pred_region
        %s145 = ssub.s32 %s12, 1
        %p146 = scmp.lt.s32.totalorder %s17, 1
        %s147 = scalar_select %p146, %s17, 1
        %s148 = smul.addr %s147, 5
        %s149 = smul.addr %s148, 4
        %s150 = scalar_lea.vmem %s0, %s149
        %p151 = pneg %p38
        %p152 = pneg %p35
        %p153 = pneg %p59
        %p154 = pneg %p56
        %p155 = pneg %p80
        %p156 = pneg %p77
        %p157 = pneg %p106
        %p158 = pneg %p103
        %s159 = sand.u32 %s93, 1
        %s160 = scalar_lea.sflag [#allocation3], %s159
        %s161 = sand.u32 %s93, 1
        %s162 = smul.addr %s161, 16
        %s163 = scalar_lea.vmem [#allocation2], %s162
        %p164 = scmp.lt.s32.totalorder %s17, 1
        %s165 = scalar_select %p164, %s17, 1
        %s166 = smul.addr %s165, 5
        %s167 = smul.addr %s166, 4
        %s168 = scalar_lea.vmem %s0, %s167
        %v170 = vld [vmem:[%s168] sm:$0xf]
        %v171 = vld [vmem:[%s168 + $0x4] sm:$0xf]
        %v172 = vld [vmem:[%s168 + $0x8] sm:$0xf]
        %v173 = vld [vmem:[%s168 + $0xc] sm:$0xf]
        %v174 = vld [vmem:[%s1] sm:$0xf]
        %v175 = vld [vmem:[%s1 + $0x4] sm:$0xf]
        %v176 = vld [vmem:[%s168 + $0x10] sm:$0x1]
        %s177 = scalar_lea.vmem %s1, 8
        %v178 = vld [vmem:[%s177] sm:$0xf]
        %v179 = vld [vmem:[%s177 + $0x4] sm:$0xf]
        %v185 = vunpack.c.l.b16 %v170
        %v186 = vunpack.c.l.b16 %v171
        %v187 = vunpack.c.l.b16 %v172
        %v188 = vunpack.c.l.b16 %v173
        %v189 = vunpack.c.l.b16 %v176
        %v190 = vpack.c.b16 %v186, %v185
        %v191 = vpack.c.b16 %v188, %v187
        %v192 = vpack.c.b16 %v189, %v189
        %vm193 = vsmask.f32 7424
        %v195 = vshrl.u32 %v190, 16
        %v197 = vshll.u32 %v190, 16
        %v199 = vrot.slane %v197, 1
        %v200 = vor.u32 %v195, %v199
        %v202 = vshll.u32 %v191, 16
        %v204 = vrot.slane %v202, 1
        %v205 = vsel %vm193, %v200, %v204
        %v206 = vshrl.u32 %v191, 16
        %v208 = vor.u32 %v206, %v204
        %v210 = vshll.u32 %v192, 16
        %v212 = vrot.slane %v210, 1
        %v213 = vsel %vm193, %v208, %v212
        %v216 = vunpack.c.l.b16 %v178
        %v217 = vunpack.c.l.b16 %v179
        %v218 = vpack.c.b16 %v217, %v216
        %vm220 = vcmask 130048
        %v222 = vsel %vm220, %v205, 0
        %v225 = vsel %vm220, %v213, 0
        %227 = vmatprep.subr.bf16.mxu0 0
        %228 = vmatpush1.bf16.msra.mxu0 0
        %229 = vmatprep.subr.bf16.mxu0 0
        %230 = vmatpush1.bf16.msra.mxu0 0
        %231 = vmatprep.subr.bf16.mxu0 0
        %232 = vmatpush1.bf16.msra.mxu0 0
        %233 = vmatprep.subr.bf16.mxu0 0
        %234 = vmatpush1.bf16.msra.mxu0 0
        %235 = vmatprep.subr.bf16.mxu0 0
        %236 = vmatpush1.bf16.msra.mxu0 0
        %237 = vmatprep.subr.bf16.mxu0 0
        %238 = vmatpush1.bf16.msra.mxu0 0
        %239 = vmatprep.subr.bf16.mxu0 0
        %240 = vmatpush1.bf16.msra.mxu0 0
        %241 = vmatprep.subr.bf16.mxu0 0
        %242 = vmatpush1.bf16.msra.mxu0 %v218
        %243 = vmatprep.subr.bf16.mxu0 0
        %244 = vmatpush2.bf16.msra.mxu0 0
        %245 = vmatprep.subr.bf16.mxu0 0
        %246 = vmatpush2.bf16.msra.mxu0 0
        %247 = vmatprep.subr.bf16.mxu0 0
        %248 = vmatpush2.bf16.msra.mxu0 0
        %249 = vmatprep.subr.bf16.mxu0 0
        %250 = vmatpush2.bf16.msra.mxu0 0
        %251 = vmatprep.subr.bf16.mxu0 0
        %252 = vmatpush2.bf16.msra.mxu0 0
        %253 = vmatprep.subr.bf16.mxu0 0
        %254 = vmatpush2.bf16.msra.mxu0 0
        %255 = vmatprep.subr.bf16.mxu0 0
        %256 = vmatpush2.bf16.msra.mxu0 0
        %257 = vmatprep.subr.bf16.mxu0 0
        %258 = vmatpush2.bf16.msra.mxu0 0
        %259 = vmatprep.mubr.bf16.mxu0 0
        %260 = vmatmul.mubr.bf16.gmra.mxu0 %v222
        %v261 = vpop.f32.mrf.mxu0
        %v262 = vadd.f32 0.0, %v261
        %v263 = vpop.f32.mrf.mxu0
        %v264 = vpop.f32.mrf.mxu0
        %v265 = vadd.f32 0.0, %v264
        %v266 = vpop.f32.mrf.mxu0
        %267 = vmatprep.mubr.bf16.mxu0 0
        %268 = vmatmul.mubr.bf16.gmra.mxu0 %v225
        %v269 = vpop.f32.mrf.mxu0
        %v270 = vadd.f32 0.0, %v269
        %v271 = vpop.f32.mrf.mxu0
        %v272 = vpop.f32.mrf.mxu0
        %v273 = vadd.f32 0.0, %v272
        %v274 = vpop.f32.mrf.mxu0
        %275 = vdwg.mxu0
        %v278 = vunpack.c.l.b16 %v174
        %v279 = vunpack.c.l.b16 %v175
        %v280 = vpack.c.b16 %v279, %v278
        %v282 = vsel %vm220, %v190, 0
        %v284 = vsel %vm220, %v191, 0
        %286 = vmatprep.subr.bf16.mxu0 0
        %287 = vmatpush1.bf16.msra.mxu0 0
        %288 = vmatprep.subr.bf16.mxu0 0
        %289 = vmatpush1.bf16.msra.mxu0 0
        %290 = vmatprep.subr.bf16.mxu0 0
        %291 = vmatpush1.bf16.msra.mxu0 0
        %292 = vmatprep.subr.bf16.mxu0 0
        %293 = vmatpush1.bf16.msra.mxu0 0
        %294 = vmatprep.subr.bf16.mxu0 0
        %295 = vmatpush1.bf16.msra.mxu0 0
        %296 = vmatprep.subr.bf16.mxu0 0
        %297 = vmatpush1.bf16.msra.mxu0 0
        %298 = vmatprep.subr.bf16.mxu0 0
        %299 = vmatpush1.bf16.msra.mxu0 0
        %300 = vmatprep.subr.bf16.mxu0 0
        %301 = vmatpush1.bf16.msra.mxu0 %v280
        %302 = vmatprep.subr.bf16.mxu0 0
        %303 = vmatpush2.bf16.msra.mxu0 0
        %304 = vmatprep.subr.bf16.mxu0 0
        %305 = vmatpush2.bf16.msra.mxu0 0
        %306 = vmatprep.subr.bf16.mxu0 0
        %307 = vmatpush2.bf16.msra.mxu0 0
        %308 = vmatprep.subr.bf16.mxu0 0
        %309 = vmatpush2.bf16.msra.mxu0 0
        %310 = vmatprep.subr.bf16.mxu0 0
        %311 = vmatpush2.bf16.msra.mxu0 0
        %312 = vmatprep.subr.bf16.mxu0 0
        %313 = vmatpush2.bf16.msra.mxu0 0
        %314 = vmatprep.subr.bf16.mxu0 0
        %315 = vmatpush2.bf16.msra.mxu0 0
        %316 = vmatprep.subr.bf16.mxu0 0
        %317 = vmatpush2.bf16.msra.mxu0 0
        %318 = vmatprep.mubr.bf16.mxu0 0
        %319 = vmatmul.mubr.bf16.gmra.mxu0 %v282
        %v320 = vpop.f32.mrf.mxu0
        %v321 = vadd.f32 %v262, %v320
        %v322 = vpop.f32.mrf.mxu0
        %v323 = vpop.f32.mrf.mxu0
        %v324 = vadd.f32 %v265, %v323
        %v325 = vpop.f32.mrf.mxu0
        %326 = vmatprep.mubr.bf16.mxu0 0
        %327 = vmatmul.mubr.bf16.gmra.mxu0 %v284
        %v328 = vpop.f32.mrf.mxu0
        %v329 = vadd.f32 %v270, %v328
        %v330 = vpop.f32.mrf.mxu0
        %v331 = vpop.f32.mrf.mxu0
        %v332 = vadd.f32 %v273, %v331
        %v333 = vpop.f32.mrf.mxu0
        %334 = vdwg.mxu0
        %v335 = vld [vmem:[%s168] sm:$0xe]
        %s336 = scalar_lea.vmem %s1, 16
        %v337 = vld [vmem:[%s336] sm:$0xf]
        %v338 = vld [vmem:[%s336 + $0x4] sm:$0xf]
        %v340 = vunpack.c.l.b16 %v335
        %v341 = vpack.c.b16 %v186, %v340
        %vm342 = vcmask 1046528
        %v343 = vrot.slane %v341, 1
        %v344 = vrot.slane %v191, 1
        %v345 = vsel %vm342, %v343, %v344
        %v346 = vrot.slane %v192, 1
        %v347 = vsel %vm342, %v344, %v346
        %v350 = vunpack.c.l.b16 %v337
        %v351 = vunpack.c.l.b16 %v338
        %v352 = vpack.c.b16 %v351, %v350
        %v355 = vsel %vm220, %v345, 0
        %v358 = vsel %vm220, %v347, 0
        %360 = vmatprep.subr.bf16.mxu0 0
        %361 = vmatpush1.bf16.msra.mxu0 0
        %362 = vmatprep.subr.bf16.mxu0 0
        %363 = vmatpush1.bf16.msra.mxu0 0
        %364 = vmatprep.subr.bf16.mxu0 0
        %365 = vmatpush1.bf16.msra.mxu0 0
        %366 = vmatprep.subr.bf16.mxu0 0
        %367 = vmatpush1.bf16.msra.mxu0 0
        %368 = vmatprep.subr.bf16.mxu0 0
        %369 = vmatpush1.bf16.msra.mxu0 0
        %370 = vmatprep.subr.bf16.mxu0 0
        %371 = vmatpush1.bf16.msra.mxu0 0
        %372 = vmatprep.subr.bf16.mxu0 0
        %373 = vmatpush1.bf16.msra.mxu0 0
        %374 = vmatprep.subr.bf16.mxu0 0
        %375 = vmatpush1.bf16.msra.mxu0 %v352
        %376 = vmatprep.subr.bf16.mxu0 0
        %377 = vmatpush2.bf16.msra.mxu0 0
        %378 = vmatprep.subr.bf16.mxu0 0
        %379 = vmatpush2.bf16.msra.mxu0 0
        %380 = vmatprep.subr.bf16.mxu0 0
        %381 = vmatpush2.bf16.msra.mxu0 0
        %382 = vmatprep.subr.bf16.mxu0 0
        %383 = vmatpush2.bf16.msra.mxu0 0
        %384 = vmatprep.subr.bf16.mxu0 0
        %385 = vmatpush2.bf16.msra.mxu0 0
        %386 = vmatprep.subr.bf16.mxu0 0
        %387 = vmatpush2.bf16.msra.mxu0 0
        %388 = vmatprep.subr.bf16.mxu0 0
        %389 = vmatpush2.bf16.msra.mxu0 0
        %390 = vmatprep.subr.bf16.mxu0 0
        %391 = vmatpush2.bf16.msra.mxu0 0
        %392 = vmatprep.mubr.bf16.mxu0 0
        %393 = vmatmul.mubr.bf16.gmra.mxu0 %v355
        %v394 = vpop.f32.mrf.mxu0
        %v395 = vadd.f32 0.0, %v394
        %v396 = vpop.f32.mrf.mxu0
        %v397 = vpop.f32.mrf.mxu0
        %v398 = vadd.f32 0.0, %v397
        %v399 = vpop.f32.mrf.mxu0
        %400 = vmatprep.mubr.bf16.mxu0 0
        %401 = vmatmul.mubr.bf16.gmra.mxu0 %v358
        %v402 = vpop.f32.mrf.mxu0
        %v403 = vadd.f32 0.0, %v402
        %v404 = vpop.f32.mrf.mxu0
        %v405 = vpop.f32.mrf.mxu0
        %v406 = vadd.f32 0.0, %v405
        %v407 = vpop.f32.mrf.mxu0
        %408 = vdwg.mxu0
        %v409 = vadd.f32 %v321, %v395
        %v410 = vadd.f32 %v324, %v398
        %v411 = vadd.f32 %v329, %v403
        %v412 = vadd.f32 %v332, %v406
        %v413 = vld [vmem:[%s2] sm:$0x1]
        %v415 = vlaneseq
        %v416 = vshrl.u32 %v415, 7
        %v417 = vsub.s32 0, %v416
        %v418 = vrot.slane %v413, %v417
        %v420 = vadd.f32 %v409, %v418
        %v421 = vadd.f32 %v410, %v418
        %v422 = vadd.f32 %v411, %v418
        %v423 = vadd.f32 %v412, %v418
        %v424 = vmul.f32 %v420, 0.5
        %v425 = vmul.f32 %v421, 0.5
        %v426 = vmul.f32 %v422, 0.5
        %v427 = vmul.f32 %v423, 0.5
        %v428 = vmul.f32 %v420, 0.70710677
        %v429 = vmul.f32 %v421, 0.70710677
        %v430 = vmul.f32 %v422, 0.70710677
        %v431 = vmul.f32 %v423, 0.70710677
        %v432 = verf.f32.pop %v428
        %v433 = verf.f32.pop %v429
        %v434 = verf.f32.pop %v430
        %v435 = verf.f32.pop %v431
        %v436 = vadd.f32 %v432, 1.0
        %v437 = vadd.f32 %v433, 1.0
        %v438 = vadd.f32 %v434, 1.0
        %v439 = vadd.f32 %v435, 1.0
        %v440 = vmul.f32 %v424, %v436
        %v441 = vmul.f32 %v425, %v437
        %v442 = vmul.f32 %v426, %v438
        %v443 = vmul.f32 %v427, %v439
        %v444 = vpack.c.bf16 %v441, %v440
        %v445 = vpack.c.bf16 %v443, %v442
        %v448 = vunpack.c.l.b16 %v444
        %v449 = vunpack.c.h.b16 %v444
        %v450 = vunpack.c.l.b16 %v445
        %v451 = vunpack.c.h.b16 %v445
        %v452 = vpack.c.b16 %v448, %v448
        %v453 = vpack.c.b16 %v449, %v449
        %v454 = vpack.c.b16 %v450, %v450
        %v455 = vpack.c.b16 %v451, %v451
        %vm460 = vcmask 519168
        %461 = vst.msk [vmem:[%s163] sm:$0xf] %vm460, %v452
        %462 = vst.msk [vmem:[%s163 + $0x4] sm:$0xf] %vm460, %v453
        %463 = vst.msk [vmem:[%s163 + $0x8] sm:$0xf] %vm460, %v454
        %464 = vst.msk [vmem:[%s163 + $0xc] sm:$0xf] %vm460, %v455
        %s465 = sand.u32 %s93, 1
        %s466 = scalar_lea.sflag [#allocation3], %s465
        %s467 = sand.u32 %s93, 1
        %s468 = smul.addr %s467, 16
        %s469 = scalar_lea.vmem [#allocation2], %s468
        // Predicated region
        $region33: #{tpu_custom_call.1} parent=31 // pred_check
          %p470 = pneg %p103
        $region34: #{tpu_custom_call.1} parent=31 // pred_check_branch
          %472 = sbr.rel (%p470) target = $region36
        $region35: #{tpu_custom_call.1} parent=31 // pred_region
          %s474 = ssub.s32 256, 256
          %475 = vsyncadd %s466, %s474
          %s476 = smul.addr %s17, 4
          %s477 = smul.addr %s476, 64
          %s478 = scalar_lea.hbm %s3, %s477
          %s479 = sshll.u32 %s469, 4
          %s480 = int_to_ptr.vmem [resolvable:$true] %s479
          %485 = dma.vmem_to_hbm [thread:$0]  %s480, 256, %s478, %s466, 64, 64, 4
        $region36: #{tpu_custom_call.1} parent=31 // pred_fallthru
          _
      $region32: #{tpu_custom_call.1} parent=5 // pred_fallthru
        _
      %p486 = scmp.le.s32.totalorder 2, %s12
      // Predicated region
      $region37: #{tpu_custom_call.1} parent=5 // pred_check
        %p487 = pneg %p486
      $region38: #{tpu_custom_call.1} parent=5 // pred_check_branch
        %489 = sbr.rel (%p487) target = $region40
      $region39: #{tpu_custom_call.1} parent=5 // pred_region
        %s490 = ssub.s32 %s12, 2
        // Predicated region
        $region41: #{tpu_custom_call.1} parent=39 // pred_check
          %p491 = pneg %p109
        $region42: #{tpu_custom_call.1} parent=39 // pred_check_branch
          %493 = sbr.rel (%p491) target = $region44
        $region43: #{tpu_custom_call.1} parent=39 // pred_region
          %s494 = sand.u32 %s94, 1
          %s495 = scalar_lea.sflag [#allocation3], %s494
          %s496 = sand.u32 %s94, 1
          %s497 = smul.addr %s496, 16
          %s498 = scalar_lea.vmem [#allocation2], %s497
          %499 = dma.done %s495, 256
        $region44: #{tpu_custom_call.1} parent=39 // pred_fallthru
          _
      $region40: #{tpu_custom_call.1} parent=5 // pred_fallthru
        _
    $region6: #{tpu_custom_call.1} parent=1 // loop_footer
      %s16 = sadd.s32 1, %s12
    $region7: #{tpu_custom_call.1} parent=1 // loop_footer_branch
      %11 = sbr.rel target = $region3
    $region8: #{tpu_custom_call.1} parent=1 // loop_exit
      _
    %500 = vsyncpa [#allocation3], 1
    %s501 = scalar_lea.sflag [#allocation3], 1
    %502 = vsyncpa %s501, 1

</llo_original>
